<compile_context>
chip_gen: v6e
topology: v6e:2x2x1
jax: 0.10.0
libtpu: 0.0.40
codegen_flags: <defaults>
</compile_context>

<pallas_src>
import functools

import jax
import jax.numpy as jnp
from jax import lax
from jax.experimental import pallas as pl
from jax.experimental.pallas import tpu as pltpu


def _round_up(x, m):
    return ((x + m - 1) // m) * m


def _vmem_budget_bytes():
    """Generation-aware scoped-VMEM budget: half of physical, capped at 64 MiB.

    v5e/v6e (128 MiB physical) -> 64 MiB, v7x (64 MiB physical) -> 32 MiB,
    fallback (query unavailable) -> 32 MiB.
    """
    cap = 64 << 20
    try:
        cap = int(getattr(pltpu.get_tpu_info(), "vmem_capacity_bytes", cap))
    except Exception:
        cap = 64 << 20
    return max(16 << 20, min(cap // 2, 64 << 20))


def _dice_kernel(p_ref, t_ref, out_ref, inter_acc, den_acc, *,
                 num_classes, n_rows, need_mask):
    """Per-(sample, foreground-class) dice, accumulated over spatial row-tiles.

    p_ref, t_ref : (1, C, TR, 128) tiles — channel slabs of full (rows, lanes) vregs
    out_ref      : (1, C-1, 1) per-foreground-class dice (written on last k)
    inter_acc    : (C-1, 128) lane-shaped running sum of pred_i * target_i
    den_acc      : (C-1, 128) lane-shaped running sum of pred_i^2 + target_i^2
    """
    k = pl.program_id(1)

    @pl.when(k == 0)
    def _():
        inter_acc[...] = jnp.zeros_like(inter_acc)
        den_acc[...] = jnp.zeros_like(den_acc)

    C = num_classes
    TR = p_ref.shape[2]

    # --- argmax over channels: running max over C slabs, pure VPU, full vregs.
    # First-max-wins tie breaking (strict '>' keeps the earliest channel), same
    # as jnp.argmax.  torch's NaN-as-max edge case is not reproduced.
    m = p_ref[0, 0]
    am = jnp.zeros((TR, 128), dtype=jnp.int32)
    for c in range(1, C):
        pc = p_ref[0, c]
        gt = pc > m
        m = jnp.where(gt, pc, m)
        am = jnp.where(gt, c, am)

    if need_mask:
        # Last spatial tile may overrun the array: rows >= n_rows hold garbage.
        row = k * TR + lax.broadcasted_iota(jnp.int32, (TR, 128), 0)
        valid = row < n_rows
        am = jnp.where(valid, am, C)          # C == "no class" -> no contribution
    else:
        valid = None

    # --- per foreground class: pred is 0/1, so pred*t == where(eq, t, 0) and
    # pred^2 == pred.  Reduce each (TR, 128) partial over sublanes once per tile
    # and fold into the persistent lane accumulators.
    for i in range(1, C):
        t_i = t_ref[0, i].astype(jnp.float32)
        if need_mask:
            t_i = jnp.where(valid, t_i, 0.0)
        eq = am == i
        inter_part = jnp.where(eq, t_i, 0.0)
        den_part = jnp.where(eq, 1.0, 0.0) + t_i * t_i
        inter_acc[pl.ds(i - 1, 1), :] += jnp.sum(inter_part, axis=0, keepdims=True)
        den_acc[pl.ds(i - 1, 1), :] += jnp.sum(den_part, axis=0, keepdims=True)

    @pl.when(k == pl.num_programs(1) - 1)
    def _():
        # Single cross-lane (XLU) reduction per sample, only at the end.
        si = jnp.sum(inter_acc[...], axis=-1, keepdims=True)   # (C-1, 1)
        sd = jnp.sum(den_acc[...], axis=-1, keepdims=True)     # (C-1, 1)
        out_ref[0] = (2.0 * si + 1.0) / (sd + 1.0)


def _dice_per_sample(p, t, *, tr_max=1024):
    """(N, C, S) predict/target -> (N, C-1) dice per sample & foreground class."""
    N, C, S = p.shape
    assert C >= 2, "need at least one foreground class"
    Cm1 = C - 1

    # Pad spatial dim to a multiple of 128 lanes only if required. Zero padding
    # is exact: padded predict columns argmax to class 0 (dropped), padded
    # target is 0, so foreground classes are untouched.
    s_pad = _round_up(S, 128)
    if s_pad != S:
        pad = ((0, 0), (0, 0), (0, s_pad - S))
        p = jnp.pad(p, pad)
        t = jnp.pad(t, pad)
    R = s_pad // 128
    # Free reshape: spatial -> (rows, 128 lanes), one full-vreg slab per channel.
    p4 = p.reshape(N, C, R, 128)
    t4 = t.reshape(N, C, R, 128)

    # Pick the biggest row-tile that keeps the double-buffered inputs within
    # ~half of the scoped VMEM budget (2x safety for compiler internals).
    budget = _vmem_budget_bytes()
    per_row = C * 128 * (p4.dtype.itemsize + t4.dtype.itemsize)
    tr_cap = max(8, (((budget // 4) // per_row) // 8) * 8)
    tr_cap = min(tr_cap, tr_max)

    if R % 8 == 0:
        TR = min(R, tr_cap)
    elif R <= 64:
        TR = R                                # full-dim block (allowed by (8,128) rule)
    else:
        TR = min((R // 8) * 8, tr_cap)
    K = pl.cdiv(R, TR)
    need_mask = (R % TR) != 0

    kernel = functools.partial(_dice_kernel, num_classes=C, n_rows=R,
                               need_mask=need_mask)

    out = pl.pallas_call(
        kernel,
        out_shape=jax.ShapeDtypeStruct((N, Cm1, 1), jnp.float32),
        grid_spec=pltpu.PrefetchScalarGridSpec(
            num_scalar_prefetch=0,
            grid=(N, K),
            in_specs=[
                pl.BlockSpec((1, C, TR, 128), lambda n, k: (n, 0, k, 0)),
                pl.BlockSpec((1, C, TR, 128), lambda n, k: (n, 0, k, 0)),
            ],
            out_specs=pl.BlockSpec((1, Cm1, 1), lambda n, k: (n, 0, 0)),
            scratch_shapes=[
                pltpu.VMEM((Cm1, 128), jnp.float32),
                pltpu.VMEM((Cm1, 128), jnp.float32),
            ],
        ),
        compiler_params=pltpu.CompilerParams(
            dimension_semantics=("parallel", "arbitrary"),
            vmem_limit_bytes=budget,
        ),
    )(p4, t4)
    return out.reshape(N, Cm1)


def dice_coefficient(predict, target):
    """DiceCoefficient.forward for one head: batch-mean dice for classes 1..C-1."""
    assert predict.shape == target.shape, "predict & target shape do not match"
    B, C = predict.shape[0], predict.shape[1]
    p = predict.reshape(B, C, -1)     # free reshape, no HBM pass
    t = target.reshape(B, C, -1)
    dice = _dice_per_sample(p, t)     # (B, C-1)
    return jnp.mean(dice, axis=0)     # (C-1,)


def multi_head_dice(predicts, targets):
    """MultiHeadDiceCoefficient.forward: one (C-1,) dice vector per head.

    Heads are processed by independent pallas_calls (same-shape heads share one
    compiled kernel): this avoids the HBM read+write pass a jnp.stack of all
    heads would cost, and per-call launch overhead is negligible vs. that copy.
    """
    assert len(predicts) == len(targets)
    return [dice_coefficient(p, t) for p, t in zip(predicts, targets)]


def _ref_dice(predict, target):
    """Pure-JAX reference mirroring the PyTorch module."""
    B, C = predict.shape[0], predict.shape[1]
    am = jnp.argmax(predict, axis=1)
    coeffs = []
    for i in range(1, C):
        pred = (am == i).astype(jnp.float32).reshape(B, -1)
        tgt = target[:, i].astype(jnp.float32).reshape(B, -1)
        num = 2.0 * jnp.sum(pred * tgt, axis=1) + 1.0
        den = jnp.sum(pred * pred + tgt * tgt, axis=1) + 1.0
        coeffs.append(jnp.mean(num / den))
    return jnp.stack(coeffs)


if __name__ == "__main__":
    n_heads = 2
    B, C, H, W = 2, 4, 16, 16

    key = jax.random.PRNGKey(0)
    predicts, targets = [], []
    for _ in range(n_heads):
        key, k1, k2 = jax.random.split(key, 3)
        logits = jax.random.normal(k1, (B, C, H, W), dtype=jnp.float32)
        labels = jax.random.randint(k2, (B, H, W), 0, C)
        onehot_t = jax.nn.one_hot(labels, C, axis=1, dtype=jnp.float32)  # (B,C,H,W)
        predicts.append(logits)
        targets.append(onehot_t)

    outs = multi_head_dice(predicts, targets)
    outs = [jax.block_until_ready(o) for o in outs]

    for h in range(n_heads):
        ref = _ref_dice(predicts[h], targets[h])
        assert jnp.allclose(outs[h], ref, atol=1e-5, rtol=1e-5), (h, outs[h], ref)

    print("KERNEL_OK")
</pallas_src>

<mosaic_0001>
module attributes {stable_mosaic.version = 11 : i64} {
  func.func @_dice_kernel(%arg0: i32, %arg1: i32, %arg2: memref<1x4x2x128xf32, #tpu.memory_space<vmem>>, %arg3: memref<1x4x2x128xf32, #tpu.memory_space<vmem>>, %arg4: memref<1x3x1xf32, #tpu.memory_space<vmem>>, %arg5: memref<3x128xf32, #tpu.memory_space<vmem>>, %arg6: memref<3x128xf32, #tpu.memory_space<vmem>>) attributes {dimension_semantics = [#tpu.dimension_semantics<parallel>, #tpu.dimension_semantics<arbitrary>], iteration_bounds = array<i64: 2, 1>, scalar_prefetch = 0 : i64, scratch_operands = 2 : i64, tpu.core_type = #tpu.core_type<tc>, window_params = [{transform_indices = @transform_0, window_bounds = array<i64: 1, 4, 2, 128>}, {transform_indices = @transform_1, window_bounds = array<i64: 1, 4, 2, 128>}, {transform_indices = @transform_2, window_bounds = array<i64: 1, 3, 1>}]} {
    %c0_i32 = arith.constant 0 : i32
    %0 = arith.cmpi eq, %arg1, %c0_i32 : i32
    %1 = arith.extui %0 : i1 to i32
    %c0_i32_0 = arith.constant 0 : i32
    %2 = arith.cmpi ne, %1, %c0_i32_0 : i32
    scf.if %2 {
      %cst_69 = arith.constant 0.000000e+00 : f32
      %89 = vector.broadcast %cst_69 : f32 to vector<3x128xf32>
      %c0_70 = arith.constant 0 : index
      %c0_71 = arith.constant 0 : index
      %90 = vector.load %arg5[%c0_70, %c0_71] : memref<3x128xf32, #tpu.memory_space<vmem>>, vector<3x128xf32>
      tpu.vector_store %arg5[%c0_70, %c0_71], %89 {strides = array<i32>} : memref<3x128xf32, #tpu.memory_space<vmem>>, vector<3x128xf32>,
      %cst_72 = arith.constant 0.000000e+00 : f32
      %91 = vector.broadcast %cst_72 : f32 to vector<3x128xf32>
      %c0_73 = arith.constant 0 : index
      %c0_74 = arith.constant 0 : index
      %92 = vector.load %arg6[%c0_73, %c0_74] : memref<3x128xf32, #tpu.memory_space<vmem>>, vector<3x128xf32>
      tpu.vector_store %arg6[%c0_73, %c0_74], %91 {strides = array<i32>} : memref<3x128xf32, #tpu.memory_space<vmem>>, vector<3x128xf32>,
    } else {
    }
    %c0 = arith.constant 0 : index
    %c0_1 = arith.constant 0 : index
    %c0_2 = arith.constant 0 : index
    %c0_3 = arith.constant 0 : index
    %3 = vector.load %arg2[%c0, %c0_1, %c0_2, %c0_3] : memref<1x4x2x128xf32, #tpu.memory_space<vmem>>, vector<1x1x2x128xf32>
    %4 = vector.shape_cast %3 : vector<1x1x2x128xf32> to vector<2x128xf32>
    %c0_i32_4 = arith.constant 0 : i32
    %5 = vector.broadcast %c0_i32_4 : i32 to vector<2x128xi32>
    %c0_5 = arith.constant 0 : index
    %c1 = arith.constant 1 : index
    %c0_6 = arith.constant 0 : index
    %c0_7 = arith.constant 0 : index
    %6 = vector.load %arg2[%c0_5, %c1, %c0_6, %c0_7] : memref<1x4x2x128xf32, #tpu.memory_space<vmem>>, vector<1x1x2x128xf32>
    %7 = vector.shape_cast %6 : vector<1x1x2x128xf32> to vector<2x128xf32>
    %8 = arith.cmpf ogt, %7, %4 : vector<2x128xf32>
    %9 = arith.select %8, %7, %4 : vector<2x128xi1>, vector<2x128xf32>
    %c1_i32 = arith.constant 1 : i32
    %10 = vector.broadcast %c1_i32 : i32 to vector<2x128xi32>
    %11 = arith.select %8, %10, %5 : vector<2x128xi1>, vector<2x128xi32>
    %c0_8 = arith.constant 0 : index
    %c2 = arith.constant 2 : index
    %c0_9 = arith.constant 0 : index
    %c0_10 = arith.constant 0 : index
    %12 = vector.load %arg2[%c0_8, %c2, %c0_9, %c0_10] : memref<1x4x2x128xf32, #tpu.memory_space<vmem>>, vector<1x1x2x128xf32>
    %13 = vector.shape_cast %12 : vector<1x1x2x128xf32> to vector<2x128xf32>
    %14 = arith.cmpf ogt, %13, %9 : vector<2x128xf32>
    %15 = arith.select %14, %13, %9 : vector<2x128xi1>, vector<2x128xf32>
    %c2_i32 = arith.constant 2 : i32
    %16 = vector.broadcast %c2_i32 : i32 to vector<2x128xi32>
    %17 = arith.select %14, %16, %11 : vector<2x128xi1>, vector<2x128xi32>
    %c0_11 = arith.constant 0 : index
    %c3 = arith.constant 3 : index
    %c0_12 = arith.constant 0 : index
    %c0_13 = arith.constant 0 : index
    %18 = vector.load %arg2[%c0_11, %c3, %c0_12, %c0_13] : memref<1x4x2x128xf32, #tpu.memory_space<vmem>>, vector<1x1x2x128xf32>
    %19 = vector.shape_cast %18 : vector<1x1x2x128xf32> to vector<2x128xf32>
    %20 = arith.cmpf ogt, %19, %15 : vector<2x128xf32>
    %c3_i32 = arith.constant 3 : i32
    %21 = vector.broadcast %c3_i32 : i32 to vector<2x128xi32>
    %22 = arith.select %20, %21, %17 : vector<2x128xi1>, vector<2x128xi32>
    %c0_14 = arith.constant 0 : index
    %c1_15 = arith.constant 1 : index
    %c0_16 = arith.constant 0 : index
    %c0_17 = arith.constant 0 : index
    %23 = vector.load %arg3[%c0_14, %c1_15, %c0_16, %c0_17] : memref<1x4x2x128xf32, #tpu.memory_space<vmem>>, vector<1x1x2x128xf32>
    %24 = vector.shape_cast %23 : vector<1x1x2x128xf32> to vector<2x128xf32>
    %c1_i32_18 = arith.constant 1 : i32
    %25 = vector.broadcast %c1_i32_18 : i32 to vector<2x128xi32>
    %26 = arith.cmpi eq, %22, %25 : vector<2x128xi32>
    %cst = arith.constant 0.000000e+00 : f32
    %27 = vector.broadcast %cst : f32 to vector<2x128xf32>
    %28 = arith.select %26, %24, %27 : vector<2x128xi1>, vector<2x128xf32>
    %cst_19 = arith.constant 1.000000e+00 : f32
    %cst_20 = arith.constant 0.000000e+00 : f32
    %29 = vector.broadcast %cst_19 : f32 to vector<2x128xf32>
    %30 = vector.broadcast %cst_20 : f32 to vector<2x128xf32>
    %31 = arith.select %26, %29, %30 : vector<2x128xi1>, vector<2x128xf32>
    %32 = arith.mulf %24, %24 : vector<2x128xf32>
    %33 = arith.addf %31, %32 : vector<2x128xf32>
    %c0_21 = arith.constant 0 : index
    %c0_22 = arith.constant 0 : index
    %34 = vector.load %arg5[%c0_21, %c0_22] : memref<3x128xf32, #tpu.memory_space<vmem>>, vector<1x128xf32>
    %cst_23 = arith.constant dense<0.000000e+00> : vector<128xf32>
    %35 = vector.multi_reduction <add>, %28, %cst_23 [0] : vector<2x128xf32> to vector<128xf32>
    %36 = vector.shape_cast %35 : vector<128xf32> to vector<1x128xf32>
    %37 = arith.addf %34, %36 : vector<1x128xf32>
    %c0_24 = arith.constant 0 : index
    %c0_25 = arith.constant 0 : index
    %38 = vector.load %arg5[%c0_24, %c0_25] : memref<3x128xf32, #tpu.memory_space<vmem>>, vector<1x128xf32>
    tpu.vector_store %arg5[%c0_24, %c0_25], %37 {strides = array<i32>} : memref<3x128xf32, #tpu.memory_space<vmem>>, vector<1x128xf32>,
    %c0_26 = arith.constant 0 : index
    %c0_27 = arith.constant 0 : index
    %39 = vector.load %arg6[%c0_26, %c0_27] : memref<3x128xf32, #tpu.memory_space<vmem>>, vector<1x128xf32>
    %cst_28 = arith.constant dense<0.000000e+00> : vector<128xf32>
    %40 = vector.multi_reduction <add>, %33, %cst_28 [0] : vector<2x128xf32> to vector<128xf32>
    %41 = vector.shape_cast %40 : vector<128xf32> to vector<1x128xf32>
    %42 = arith.addf %39, %41 : vector<1x128xf32>
    %c0_29 = arith.constant 0 : index
    %c0_30 = arith.constant 0 : index
    %43 = vector.load %arg6[%c0_29, %c0_30] : memref<3x128xf32, #tpu.memory_space<vmem>>, vector<1x128xf32>
    tpu.vector_store %arg6[%c0_29, %c0_30], %42 {strides = array<i32>} : memref<3x128xf32, #tpu.memory_space<vmem>>, vector<1x128xf32>,
    %c0_31 = arith.constant 0 : index
    %c2_32 = arith.constant 2 : index
    %c0_33 = arith.constant 0 : index
    %c0_34 = arith.constant 0 : index
    %44 = vector.load %arg3[%c0_31, %c2_32, %c0_33, %c0_34] : memref<1x4x2x128xf32, #tpu.memory_space<vmem>>, vector<1x1x2x128xf32>
    %45 = vector.shape_cast %44 : vector<1x1x2x128xf32> to vector<2x128xf32>
    %c2_i32_35 = arith.constant 2 : i32
    %46 = vector.broadcast %c2_i32_35 : i32 to vector<2x128xi32>
    %47 = arith.cmpi eq, %22, %46 : vector<2x128xi32>
    %cst_36 = arith.constant 0.000000e+00 : f32
    %48 = vector.broadcast %cst_36 : f32 to vector<2x128xf32>
    %49 = arith.select %47, %45, %48 : vector<2x128xi1>, vector<2x128xf32>
    %cst_37 = arith.constant 1.000000e+00 : f32
    %cst_38 = arith.constant 0.000000e+00 : f32
    %50 = vector.broadcast %cst_37 : f32 to vector<2x128xf32>
    %51 = vector.broadcast %cst_38 : f32 to vector<2x128xf32>
    %52 = arith.select %47, %50, %51 : vector<2x128xi1>, vector<2x128xf32>
    %53 = arith.mulf %45, %45 : vector<2x128xf32>
    %54 = arith.addf %52, %53 : vector<2x128xf32>
    %c1_39 = arith.constant 1 : index
    %c0_40 = arith.constant 0 : index
    %55 = vector.load %arg5[%c1_39, %c0_40] : memref<3x128xf32, #tpu.memory_space<vmem>>, vector<1x128xf32>
    %cst_41 = arith.constant dense<0.000000e+00> : vector<128xf32>
    %56 = vector.multi_reduction <add>, %49, %cst_41 [0] : vector<2x128xf32> to vector<128xf32>
    %57 = vector.shape_cast %56 : vector<128xf32> to vector<1x128xf32>
    %58 = arith.addf %55, %57 : vector<1x128xf32>
    %c1_42 = arith.constant 1 : index
    %c0_43 = arith.constant 0 : index
    %59 = vector.load %arg5[%c1_42, %c0_43] : memref<3x128xf32, #tpu.memory_space<vmem>>, vector<1x128xf32>
    tpu.vector_store %arg5[%c1_42, %c0_43], %58 {strides = array<i32>} : memref<3x128xf32, #tpu.memory_space<vmem>>, vector<1x128xf32>,
    %c1_44 = arith.constant 1 : index
    %c0_45 = arith.constant 0 : index
    %60 = vector.load %arg6[%c1_44, %c0_45] : memref<3x128xf32, #tpu.memory_space<vmem>>, vector<1x128xf32>
    %cst_46 = arith.constant dense<0.000000e+00> : vector<128xf32>
    %61 = vector.multi_reduction <add>, %54, %cst_46 [0] : vector<2x128xf32> to vector<128xf32>
    %62 = vector.shape_cast %61 : vector<128xf32> to vector<1x128xf32>
    %63 = arith.addf %60, %62 : vector<1x128xf32>
    %c1_47 = arith.constant 1 : index
    %c0_48 = arith.constant 0 : index
    %64 = vector.load %arg6[%c1_47, %c0_48] : memref<3x128xf32, #tpu.memory_space<vmem>>, vector<1x128xf32>
    tpu.vector_store %arg6[%c1_47, %c0_48], %63 {strides = array<i32>} : memref<3x128xf32, #tpu.memory_space<vmem>>, vector<1x128xf32>,
    %c0_49 = arith.constant 0 : index
    %c3_50 = arith.constant 3 : index
    %c0_51 = arith.constant 0 : index
    %c0_52 = arith.constant 0 : index
    %65 = vector.load %arg3[%c0_49, %c3_50, %c0_51, %c0_52] : memref<1x4x2x128xf32, #tpu.memory_space<vmem>>, vector<1x1x2x128xf32>
    %66 = vector.shape_cast %65 : vector<1x1x2x128xf32> to vector<2x128xf32>
    %c3_i32_53 = arith.constant 3 : i32
    %67 = vector.broadcast %c3_i32_53 : i32 to vector<2x128xi32>
    %68 = arith.cmpi eq, %22, %67 : vector<2x128xi32>
    %cst_54 = arith.constant 0.000000e+00 : f32
    %69 = vector.broadcast %cst_54 : f32 to vector<2x128xf32>
    %70 = arith.select %68, %66, %69 : vector<2x128xi1>, vector<2x128xf32>
    %cst_55 = arith.constant 1.000000e+00 : f32
    %cst_56 = arith.constant 0.000000e+00 : f32
    %71 = vector.broadcast %cst_55 : f32 to vector<2x128xf32>
    %72 = vector.broadcast %cst_56 : f32 to vector<2x128xf32>
    %73 = arith.select %68, %71, %72 : vector<2x128xi1>, vector<2x128xf32>
    %74 = arith.mulf %66, %66 : vector<2x128xf32>
    %75 = arith.addf %73, %74 : vector<2x128xf32>
    %c2_57 = arith.constant 2 : index
    %c0_58 = arith.constant 0 : index
    %76 = vector.load %arg5[%c2_57, %c0_58] : memref<3x128xf32, #tpu.memory_space<vmem>>, vector<1x128xf32>
    %cst_59 = arith.constant dense<0.000000e+00> : vector<128xf32>
    %77 = vector.multi_reduction <add>, %70, %cst_59 [0] : vector<2x128xf32> to vector<128xf32>
    %78 = vector.shape_cast %77 : vector<128xf32> to vector<1x128xf32>
    %79 = arith.addf %76, %78 : vector<1x128xf32>
    %c2_60 = arith.constant 2 : index
    %c0_61 = arith.constant 0 : index
    %80 = vector.load %arg5[%c2_60, %c0_61] : memref<3x128xf32, #tpu.memory_space<vmem>>, vector<1x128xf32>
    tpu.vector_store %arg5[%c2_60, %c0_61], %79 {strides = array<i32>} : memref<3x128xf32, #tpu.memory_space<vmem>>, vector<1x128xf32>,
    %c2_62 = arith.constant 2 : index
    %c0_63 = arith.constant 0 : index
    %81 = vector.load %arg6[%c2_62, %c0_63] : memref<3x128xf32, #tpu.memory_space<vmem>>, vector<1x128xf32>
    %cst_64 = arith.constant dense<0.000000e+00> : vector<128xf32>
    %82 = vector.multi_reduction <add>, %75, %cst_64 [0] : vector<2x128xf32> to vector<128xf32>
    %83 = vector.shape_cast %82 : vector<128xf32> to vector<1x128xf32>
    %84 = arith.addf %81, %83 : vector<1x128xf32>
    %c2_65 = arith.constant 2 : index
    %c0_66 = arith.constant 0 : index
    %85 = vector.load %arg6[%c2_65, %c0_66] : memref<3x128xf32, #tpu.memory_space<vmem>>, vector<1x128xf32>
    tpu.vector_store %arg6[%c2_65, %c0_66], %84 {strides = array<i32>} : memref<3x128xf32, #tpu.memory_space<vmem>>, vector<1x128xf32>,
    %c0_i32_67 = arith.constant 0 : i32
    %86 = arith.cmpi eq, %arg1, %c0_i32_67 : i32
    %87 = arith.extui %86 : i1 to i32
    %c0_i32_68 = arith.constant 0 : i32
    %88 = arith.cmpi ne, %87, %c0_i32_68 : i32
    scf.if %88 {
      %c0_69 = arith.constant 0 : index
      %c0_70 = arith.constant 0 : index
      %89 = vector.load %arg5[%c0_69, %c0_70] : memref<3x128xf32, #tpu.memory_space<vmem>>, vector<3x128xf32>
      %cst_71 = arith.constant dense<0.000000e+00> : vector<3xf32>
      %90 = vector.multi_reduction <add>, %89, %cst_71 [1] : vector<3x128xf32> to vector<3xf32>
      %91 = vector.shape_cast %90 : vector<3xf32> to vector<3x1xf32>
      %c0_72 = arith.constant 0 : index
      %c0_73 = arith.constant 0 : index
      %92 = vector.load %arg6[%c0_72, %c0_73] : memref<3x128xf32, #tpu.memory_space<vmem>>, vector<3x128xf32>
      %cst_74 = arith.constant dense<0.000000e+00> : vector<3xf32>
      %93 = vector.multi_reduction <add>, %92, %cst_74 [1] : vector<3x128xf32> to vector<3xf32>
      %94 = vector.shape_cast %93 : vector<3xf32> to vector<3x1xf32>
      %cst_75 = arith.constant 2.000000e+00 : f32
      %95 = vector.broadcast %cst_75 : f32 to vector<3x1xf32>
      %96 = arith.mulf %95, %91 : vector<3x1xf32>
      %cst_76 = arith.constant 1.000000e+00 : f32
      %97 = vector.broadcast %cst_76 : f32 to vector<3x1xf32>
      %98 = arith.addf %96, %97 : vector<3x1xf32>
      %cst_77 = arith.constant 1.000000e+00 : f32
      %99 = vector.broadcast %cst_77 : f32 to vector<3x1xf32>
      %100 = arith.addf %94, %99 : vector<3x1xf32>
      %101 = arith.divf %98, %100 : vector<3x1xf32>
      %c0_78 = arith.constant 0 : index
      %c0_79 = arith.constant 0 : index
      %c0_80 = arith.constant 0 : index
      %102 = vector.load %arg4[%c0_78, %c0_79, %c0_80] : memref<1x3x1xf32, #tpu.memory_space<vmem>>, vector<1x3x1xf32>
      %103 = vector.shape_cast %102 : vector<1x3x1xf32> to vector<3x1xf32>
      %104 = vector.shape_cast %101 : vector<3x1xf32> to vector<1x3x1xf32>
      tpu.vector_store %arg4[%c0_78, %c0_79, %c0_80], %104 {strides = array<i32>} : memref<1x3x1xf32, #tpu.memory_space<vmem>>, vector<1x3x1xf32>,
    } else {
    }
    return
  }
  func.func @transform_0(%arg0: i32, %arg1: i32) -> (i32, i32, i32, i32) {
    %c0_i32 = arith.constant 0 : i32
    %c0_i32_0 = arith.constant 0 : i32
    %c0_i32_1 = arith.constant 0 : i32
    return %arg0, %c0_i32, %arg1, %c0_i32_0 : i32, i32, i32, i32
  }
  func.func @transform_1(%arg0: i32, %arg1: i32) -> (i32, i32, i32, i32) {
    %c0_i32 = arith.constant 0 : i32
    %c0_i32_0 = arith.constant 0 : i32
    %c0_i32_1 = arith.constant 0 : i32
    return %arg0, %c0_i32, %arg1, %c0_i32_0 : i32, i32, i32, i32
  }
  func.func @transform_2(%arg0: i32, %arg1: i32) -> (i32, i32, i32) {
    %c0_i32 = arith.constant 0 : i32
    %c0_i32_0 = arith.constant 0 : i32
    %c0_i32_1 = arith.constant 0 : i32
    return %arg0, %c0_i32, %c0_i32_0 : i32, i32, i32
  }
}

</mosaic_0001>

<llo_original>
// kernel: tpu_custom_call.1
$region0: #{tpu_custom_call.1}
  #allocation0 [shape = 'u32[]', space=smem, size = 0x4, offset = 0x4, fixed_abs, tag = 'smem constant byte address 0x4 - core index']
  #allocation1 [shape = 'u32[144,128]{1,0:T(1,128)}', space=vmem, size = 0x12000, scoped, tag = 'internal scratch']
  #allocation2 [shape = 'f32[3,128]{1,0:T(4,128)}', space=vmem, size = 0x800, scoped, tag = 'scratch operand']
  #allocation3 [shape = 'f32[3,128]{1,0:T(4,128)}', space=vmem, size = 0x800, scoped, tag = 'scratch operand']
  %s0 = inlined_call_operand.hbm [shape: f32[2,4,2,128], index: 0, kind: input, shape index: {}]
  %s1 = inlined_call_operand.hbm [shape: f32[2,4,2,128], index: 1, kind: input, shape index: {}]
  %s2 = inlined_call_operand.vmem [shape: f32[2,3,1], index: 2, kind: output, shape index: {}]
  %s3 = sld [smem:[#allocation0]]
  $region57: #{tpu_custom_call.1} parent=0
    _
  %s5 = ssub.s32 1, %s3
  %s6 = scalar_select 0, %s5, %s3
  $region1: #{tpu_custom_call.1} parent=0
    #allocation4 [shape = 'u8[8192]{0}', space=vmem, size = 0x2000, scoped, tag = 'input window, operand 0']
    #allocation5 [shape = 's32[2]{0}', space=sflag, size = 0x8, scoped, tag = 'scoped memory for tpu_custom_call.1']
    #allocation6 [shape = 'u8[8192]{0}', space=vmem, size = 0x2000, scoped, tag = 'input window, operand 1']
    #allocation7 [shape = 's32[2]{0}', space=sflag, size = 0x8, scoped, tag = 'scoped memory for tpu_custom_call.1']
    %7 = vsyncpa [#allocation5], 0
    %s8 = scalar_lea.sflag [#allocation5], 1
    %9 = vsyncpa %s8, 0
    %10 = vsyncpa [#allocation7], 0
    %s11 = scalar_lea.sflag [#allocation7], 1
    %12 = vsyncpa %s11, 0
    loop: start=0, step=1, limit=4
    $region2: #{tpu_custom_call.1} parent=1 // loop_pre_header
      _
    $region3: #{tpu_custom_call.1} parent=1 // loop_header
      %s14 = sphi 0, %s18
      %p15 = scmp.ge.s32.totalorder %s14, 4
      %s21 = sphi 0, %s33
      %s22 = sphi 0, %s29
      %s23 = sphi 0, %s21
      %s24 = sphi 0, %s22
      %s25 = sphi 0, %s23
      %s26 = sphi 0, %s24
      %s38 = sphi 0, %s40
      %s41 = sphi 0, %s38
      %s42 = sphi 0, %s41
      %s58 = sphi 0, %s42
      %s66 = sphi 0, %s68
      %s69 = sphi 0, %s66
      %s70 = sphi 0, %s69
      %s86 = sphi 0, %s70
      %s92 = sphi 0, %s94
      %s95 = sphi 0, %s92
      %s96 = sphi 0, %s95
      %s112 = sphi 0, %s96
    $region4: #{tpu_custom_call.1} parent=1 // loop_header_branch
      %17 = sbr.rel (%p15) target = $region8
    $region5: #{tpu_custom_call.1} parent=1 // loop_body
      %s19 = ssub.s32 %s14, 1
      %s20 = ssub.s32 %s14, 2
      %s27 = sadd.s32 1, %s22
      %p28 = scmp.ge.s32.totalorder %s27, 1
      %s29 = scalar_select %p28, 0, %s27
      %s30 = sadd.s32 1, %s21
      %s31 = scalar_select %p28, %s30, %s21
      %p32 = scmp.ge.s32.totalorder %s31, 2
      %s33 = scalar_select %p32, 0, %s31
      %s34 = ssub.s32 %s21, %s33
      %s35 = ssub.s32 %s22, %s29
      %s36 = sor.u32 %s34, %s35
      %p37 = scmp.eq.s32.totalorder %s36, 0
      %s39 = sadd.s32 %s38, 1
      %s40 = scalar_select %p37, %s38, %s39
      %p43 = pneg %p37
      %p44 = scmp.eq.s32.totalorder %s14, 1
      %p45 = por %p43, %p44
      %p46 = scmp.ne.s32.totalorder %s38, %s41
      %p47 = scmp.eq.s32.totalorder %s14, 0
      %p48 = por %p46, %p47
      %p49 = scmp.ne.s32.totalorder %s38, %s41
      %p50 = scmp.eq.s32.totalorder %s19, 1
      %p51 = por %p49, %p50
      %p52 = scmp.ne.s32.totalorder %s41, %s42
      %p53 = scmp.eq.s32.totalorder %s19, 0
      %p54 = por %p52, %p53
      %p55 = scmp.ne.s32.totalorder %s41, %s42
      %p56 = scmp.eq.s32.totalorder %s20, 1
      %p57 = por %p55, %p56
      %p59 = scmp.ne.s32.totalorder %s42, %s58
      %p60 = scmp.eq.s32.totalorder %s20, 0
      %p61 = por %p59, %p60
      %s62 = ssub.s32 %s21, %s33
      %s63 = ssub.s32 %s22, %s29
      %s64 = sor.u32 %s62, %s63
      %p65 = scmp.eq.s32.totalorder %s64, 0
      %s67 = sadd.s32 %s66, 1
      %s68 = scalar_select %p65, %s66, %s67
      %p71 = pneg %p65
      %p72 = scmp.eq.s32.totalorder %s14, 1
      %p73 = por %p71, %p72
      %p74 = scmp.ne.s32.totalorder %s66, %s69
      %p75 = scmp.eq.s32.totalorder %s14, 0
      %p76 = por %p74, %p75
      %p77 = scmp.ne.s32.totalorder %s66, %s69
      %p78 = scmp.eq.s32.totalorder %s19, 1
      %p79 = por %p77, %p78
      %p80 = scmp.ne.s32.totalorder %s69, %s70
      %p81 = scmp.eq.s32.totalorder %s19, 0
      %p82 = por %p80, %p81
      %p83 = scmp.ne.s32.totalorder %s69, %s70
      %p84 = scmp.eq.s32.totalorder %s20, 1
      %p85 = por %p83, %p84
      %p87 = scmp.ne.s32.totalorder %s70, %s86
      %p88 = scmp.eq.s32.totalorder %s20, 0
      %p89 = por %p87, %p88
      %s90 = ssub.s32 %s21, %s33
      %p91 = scmp.eq.s32.totalorder %s90, 0
      %s93 = sadd.s32 %s92, 1
      %s94 = scalar_select %p91, %s92, %s93
      %p97 = pneg %p91
      %p98 = scmp.eq.s32.totalorder %s14, 1
      %p99 = por %p97, %p98
      %p100 = scmp.ne.s32.totalorder %s92, %s95
      %p101 = scmp.eq.s32.totalorder %s14, 0
      %p102 = por %p100, %p101
      %p103 = scmp.ne.s32.totalorder %s92, %s95
      %p104 = scmp.eq.s32.totalorder %s19, 1
      %p105 = por %p103, %p104
      %p106 = scmp.ne.s32.totalorder %s95, %s96
      %p107 = scmp.eq.s32.totalorder %s19, 0
      %p108 = por %p106, %p107
      %p109 = scmp.ne.s32.totalorder %s95, %s96
      %p110 = scmp.eq.s32.totalorder %s20, 1
      %p111 = por %p109, %p110
      %p113 = scmp.ne.s32.totalorder %s96, %s112
      %p114 = scmp.eq.s32.totalorder %s20, 0
      %p115 = por %p113, %p114
      %p116 = scmp.le.s32.totalorder 1, %s14
      %p117 = scmp.lt.s32.totalorder %s14, 3
      %p118 = pnand %p116, %p117
      %p119 = pneg %p118
      // Predicated region
      $region9: #{tpu_custom_call.1} parent=5 // pred_check
        _
      $region10: #{tpu_custom_call.1} parent=5 // pred_check_branch
        %121 = sbr.rel (%p118) target = $region12
      $region11: #{tpu_custom_call.1} parent=5 // pred_region
        %s122 = ssub.s32 %s14, 1
      $region12: #{tpu_custom_call.1} parent=5 // pred_fallthru
        _
      %p123 = scmp.lt.s32.totalorder %s14, 2
      // Predicated region
      $region13: #{tpu_custom_call.1} parent=5 // pred_check
        %p124 = pneg %p123
      $region14: #{tpu_custom_call.1} parent=5 // pred_check_branch
        %126 = sbr.rel (%p124) target = $region16
      $region15: #{tpu_custom_call.1} parent=5 // pred_region
        // Predicated region
        $region17: #{tpu_custom_call.1} parent=15 // pred_check
          %p127 = pneg %p48
        $region18: #{tpu_custom_call.1} parent=15 // pred_check_branch
          %129 = sbr.rel (%p127) target = $region20
        $region19: #{tpu_custom_call.1} parent=15 // pred_region
          %s130 = sand.u32 %s38, 1
          %s131 = scalar_lea.sflag [#allocation5], %s130
          %s132 = sand.u32 %s38, 1
          %s133 = smul.addr %s132, 8
          %s134 = scalar_lea.vmem [#allocation4], %s133
          %s136 = ssub.s32 128, 128
          %137 = vsyncadd %s131, %s136
          %s138 = smul.addr %s21, 4
          %s139 = sadd.s32 %s22, %s138
          %s140 = smul.addr %s139, 32
          %s141 = scalar_lea.hbm %s0, %s140
          %s142 = sshll.u32 %s134, 4
          %s143 = int_to_ptr.vmem [resolvable:$true] %s142
          %148 = dma.hbm_to_vmem [thread:$0]  %s141, 128, %s143, %s131, 32, 32, 2
        $region20: #{tpu_custom_call.1} parent=15 // pred_fallthru
          _
        // Predicated region
        $region21: #{tpu_custom_call.1} parent=15 // pred_check
          %p149 = pneg %p76
        $region22: #{tpu_custom_call.1} parent=15 // pred_check_branch
          %151 = sbr.rel (%p149) target = $region24
        $region23: #{tpu_custom_call.1} parent=15 // pred_region
          %s152 = sand.u32 %s66, 1
          %s153 = scalar_lea.sflag [#allocation7], %s152
          %s154 = sand.u32 %s66, 1
          %s155 = smul.addr %s154, 8
          %s156 = scalar_lea.vmem [#allocation6], %s155
          %s158 = ssub.s32 128, 128
          %159 = vsyncadd %s153, %s158
          %s160 = smul.addr %s21, 4
          %s161 = sadd.s32 %s22, %s160
          %s162 = smul.addr %s161, 32
          %s163 = scalar_lea.hbm %s1, %s162
          %s164 = sshll.u32 %s156, 4
          %s165 = int_to_ptr.vmem [resolvable:$true] %s164
          %170 = dma.hbm_to_vmem [thread:$0]  %s163, 128, %s165, %s153, 32, 32, 2
        $region24: #{tpu_custom_call.1} parent=15 // pred_fallthru
          _
      $region16: #{tpu_custom_call.1} parent=5 // pred_fallthru
        _
      %p171 = scmp.le.s32.totalorder 1, %s14
      %p172 = scmp.lt.s32.totalorder %s14, 3
      %p173 = pnand %p171, %p172
      %p174 = pneg %p173
      // Predicated region
      $region25: #{tpu_custom_call.1} parent=5 // pred_check
        _
      $region26: #{tpu_custom_call.1} parent=5 // pred_check_branch
        %176 = sbr.rel (%p173) target = $region28
      $region27: #{tpu_custom_call.1} parent=5 // pred_region
        %s177 = ssub.s32 %s14, 1
        %s178 = sand.u32 %s41, 1
        %s179 = scalar_lea.sflag [#allocation5], %s178
        %s180 = sand.u32 %s41, 1
        %s181 = smul.addr %s180, 8
        %s182 = scalar_lea.vmem [#allocation4], %s181
        // Predicated region
        $region29: #{tpu_custom_call.1} parent=27 // pred_check
          %p183 = pneg %p54
        $region30: #{tpu_custom_call.1} parent=27 // pred_check_branch
          %185 = sbr.rel (%p183) target = $region32
        $region31: #{tpu_custom_call.1} parent=27 // pred_region
          %186 = dma.done %s179, 128
        $region32: #{tpu_custom_call.1} parent=27 // pred_fallthru
          _
        %s187 = sand.u32 %s69, 1
        %s188 = scalar_lea.sflag [#allocation7], %s187
        %s189 = sand.u32 %s69, 1
        %s190 = smul.addr %s189, 8
        %s191 = scalar_lea.vmem [#allocation6], %s190
        // Predicated region
        $region33: #{tpu_custom_call.1} parent=27 // pred_check
          %p192 = pneg %p82
        $region34: #{tpu_custom_call.1} parent=27 // pred_check_branch
          %194 = sbr.rel (%p192) target = $region36
        $region35: #{tpu_custom_call.1} parent=27 // pred_region
          %195 = dma.done %s188, 128
        $region36: #{tpu_custom_call.1} parent=27 // pred_fallthru
          _
        %s196 = sand.u32 %s41, 1
        %s197 = scalar_lea.sflag [#allocation5], %s196
        %s198 = sand.u32 %s41, 1
        %s199 = smul.addr %s198, 8
        %s200 = scalar_lea.vmem [#allocation4], %s199
        %p201 = pneg %p54
        %p202 = pneg %p51
        %s203 = sand.u32 %s69, 1
        %s204 = scalar_lea.sflag [#allocation7], %s203
        %s205 = sand.u32 %s69, 1
        %s206 = smul.addr %s205, 8
        %s207 = scalar_lea.vmem [#allocation6], %s206
        %p208 = pneg %p82
        %p209 = pneg %p79
        %p210 = pneg %p108
        %p211 = pneg %p105
        %p212 = scmp.lt.s32.totalorder %s23, 1
        %s213 = scalar_select %p212, %s23, 1
        %s214 = smul.addr %s213, 4
        %s215 = scalar_lea.vmem %s2, %s214
        %p216 = scmp.lt.s32.totalorder %s23, 1
        %s217 = scalar_select %p216, %s23, 1
        %s218 = smul.addr %s217, 4
        %s219 = scalar_lea.vmem %s2, %s218
        %p220 = scmp.eq.s32.totalorder %s24, 0
        // Predicated region
        $region37: #{tpu_custom_call.1} parent=27 // pred_check
          %p221 = pneg %p220
        $region38: #{tpu_custom_call.1} parent=27 // pred_check_branch
          %223 = sbr.rel (%p221) target = $region40
        $region39: #{tpu_custom_call.1} parent=27 // pred_region
          %224 = vst [vmem:[#allocation2] sm:$0x7] 0.0
          %225 = vst [vmem:[#allocation3] sm:$0x7] 0.0
        $region40: #{tpu_custom_call.1} parent=27 // pred_fallthru
          _
        %v226 = vld [vmem:[%s182] sm:$0x3]
        %s227 = scalar_lea.vmem %s182, 2 [#allocation4]
        %v228 = vld [vmem:[%s227] sm:$0x3]
        %vm229 = vcmp.gt.f32.partialorder %v228, %v226
        %v230 = vsel %vm229, %v228, %v226
        %v231 = vsel %vm229, 1, 0
        %s232 = scalar_lea.vmem %s182, 4 [#allocation4]
        %v233 = vld [vmem:[%s232] sm:$0x3]
        %vm234 = vcmp.gt.f32.partialorder %v233, %v230
        %v235 = vsel %vm234, %v233, %v230
        %v236 = vsel %vm234, 2, %v231
        %s237 = scalar_lea.vmem %s182, 6 [#allocation4]
        %v238 = vld [vmem:[%s237] sm:$0x3]
        %vm239 = vcmp.gt.f32.partialorder %v238, %v235
        %v240 = vsel %vm239, 3, %v236
        %s241 = scalar_lea.vmem %s191, 2 [#allocation6]
        %v242 = vld [vmem:[%s241] sm:$0x3]
        %vm243 = vcmp.eq.s32.totalorder %v240, 1
        %v244 = vsel %vm243, %v242, 0.0
        %v245 = vsel %vm243, 1.0, 0.0
        %v246 = vmul.f32 %v242, %v242
        %v247 = vadd.f32 %v245, %v246
        %v248 = vld [vmem:[#allocation2] sm:$0x1]
        %vm249 = vcmask 1041408
        %v250 = vsel %vm249, %v244, 0.0
        %v251 = vrot.slane %v250, 4
        %v252 = vadd.f32 %v250, %v251
        %v253 = vrot.slane %v252, 2
        %v254 = vadd.f32 %v252, %v253
        %v255 = vrot.slane %v254, 1
        %v256 = vadd.f32 %v254, %v255
        %v257 = vadd.f32 %v248, %v256
        %258 = vst [vmem:[#allocation2] sm:$0x1] %v257
        %v259 = vld [vmem:[#allocation3] sm:$0x1]
        %v260 = vsel %vm249, %v247, 0.0
        %v261 = vrot.slane %v260, 4
        %v262 = vadd.f32 %v260, %v261
        %v263 = vrot.slane %v262, 2
        %v264 = vadd.f32 %v262, %v263
        %v265 = vrot.slane %v264, 1
        %v266 = vadd.f32 %v264, %v265
        %v267 = vadd.f32 %v259, %v266
        %268 = vst [vmem:[#allocation3] sm:$0x1] %v267
        %s269 = scalar_lea.vmem %s191, 4 [#allocation6]
        %v270 = vld [vmem:[%s269] sm:$0x3]
        %vm271 = vcmp.eq.s32.totalorder %v240, 2
        %v272 = vsel %vm271, %v270, 0.0
        %v273 = vsel %vm271, 1.0, 0.0
        %v274 = vmul.f32 %v270, %v270
        %v275 = vadd.f32 %v273, %v274
        %v276 = vld [vmem:[#allocation2 + $0x1] sm:$0x1]
        %v277 = vsel %vm249, %v272, 0.0
        %v278 = vrot.slane %v277, 4
        %v279 = vadd.f32 %v277, %v278
        %v280 = vrot.slane %v279, 2
        %v281 = vadd.f32 %v279, %v280
        %v282 = vrot.slane %v281, 1
        %v283 = vadd.f32 %v281, %v282
        %v284 = vadd.f32 %v276, %v283
        %285 = vst [vmem:[#allocation2 + $0x1] sm:$0x1] %v284
        %v286 = vld [vmem:[#allocation3 + $0x1] sm:$0x1]
        %v287 = vsel %vm249, %v275, 0.0
        %v288 = vrot.slane %v287, 4
        %v289 = vadd.f32 %v287, %v288
        %v290 = vrot.slane %v289, 2
        %v291 = vadd.f32 %v289, %v290
        %v292 = vrot.slane %v291, 1
        %v293 = vadd.f32 %v291, %v292
        %v294 = vadd.f32 %v286, %v293
        %295 = vst [vmem:[#allocation3 + $0x1] sm:$0x1] %v294
        %s296 = scalar_lea.vmem %s191, 6 [#allocation6]
        %v297 = vld [vmem:[%s296] sm:$0x3]
        %vm298 = vcmp.eq.s32.totalorder %v240, 3
        %v299 = vsel %vm298, %v297, 0.0
        %v300 = vsel %vm298, 1.0, 0.0
        %v301 = vmul.f32 %v297, %v297
        %v302 = vadd.f32 %v300, %v301
        %v303 = vld [vmem:[#allocation2 + $0x2] sm:$0x1]
        %v304 = vsel %vm249, %v299, 0.0
        %v305 = vrot.slane %v304, 4
        %v306 = vadd.f32 %v304, %v305
        %v307 = vrot.slane %v306, 2
        %v308 = vadd.f32 %v306, %v307
        %v309 = vrot.slane %v308, 1
        %v310 = vadd.f32 %v308, %v309
        %v311 = vadd.f32 %v303, %v310
        %312 = vst [vmem:[#allocation2 + $0x2] sm:$0x1] %v311
        %v313 = vld [vmem:[#allocation3 + $0x2] sm:$0x1]
        %v314 = vsel %vm249, %v302, 0.0
        %v315 = vrot.slane %v314, 4
        %v316 = vadd.f32 %v314, %v315
        %v317 = vrot.slane %v316, 2
        %v318 = vadd.f32 %v316, %v317
        %v319 = vrot.slane %v318, 1
        %v320 = vadd.f32 %v318, %v319
        %v321 = vadd.f32 %v313, %v320
        %322 = vst [vmem:[#allocation3 + $0x2] sm:$0x1] %v321
        // Predicated region
        $region41: #{tpu_custom_call.1} parent=27 // pred_check
          %p323 = pneg %p220
        $region42: #{tpu_custom_call.1} parent=27 // pred_check_branch
          %325 = sbr.rel (%p323) target = $region44
        $region43: #{tpu_custom_call.1} parent=27 // pred_region
          %v326 = vld [vmem:[#allocation2] sm:$0x7]
          %vm327 = vcmask 1042432
          %v328 = vsel %vm327, %v326, 0.0
          %329 = vadd.xlane.f32.xlu0 %v328
          %v330 = vpop.xlane.xlu0 %329
          %v331 = vld [vmem:[#allocation3] sm:$0x7]
          %v332 = vsel %vm327, %v331, 0.0
          %333 = vadd.xlane.f32.xlu0 %v332
          %v334 = vpop.xlane.xlu0 %333
          %v335 = vmul.f32 %v330, 2.0
          %v336 = vadd.f32 %v335, 1.0
          %v337 = vadd.f32 %v334, 1.0
          %v338 = vrcp.pop %v337
          %v339 = vmul.f32 %v336, %v338
          %vm340 = vcmask 2048
          %341 = vst.msk [vmem:[%s219] sm:$0x7] %vm340, %v339
        $region44: #{tpu_custom_call.1} parent=27 // pred_fallthru
          _
        %p342 = scmp.lt.s32.totalorder %s23, 1
        %s343 = scalar_select %p342, %s23, 1
        %s344 = smul.addr %s343, 4
        %s345 = scalar_lea.vmem %s2, %s344
        // Predicated region
        $region45: #{tpu_custom_call.1} parent=27 // pred_check
          %p346 = pneg %p105
        $region46: #{tpu_custom_call.1} parent=27 // pred_check_branch
          %348 = sbr.rel (%p346) target = $region48
        $region47: #{tpu_custom_call.1} parent=27 // pred_region
          _
        $region48: #{tpu_custom_call.1} parent=27 // pred_fallthru
          _
      $region28: #{tpu_custom_call.1} parent=5 // pred_fallthru
        _
      %p349 = scmp.le.s32.totalorder 2, %s14
      // Predicated region
      $region49: #{tpu_custom_call.1} parent=5 // pred_check
        %p350 = pneg %p349
      $region50: #{tpu_custom_call.1} parent=5 // pred_check_branch
        %352 = sbr.rel (%p350) target = $region52
      $region51: #{tpu_custom_call.1} parent=5 // pred_region
        %s353 = ssub.s32 %s14, 2
        // Predicated region
        $region53: #{tpu_custom_call.1} parent=51 // pred_check
          %p354 = pneg %p111
        $region54: #{tpu_custom_call.1} parent=51 // pred_check_branch
          %356 = sbr.rel (%p354) target = $region56
        $region55: #{tpu_custom_call.1} parent=51 // pred_region
          %p357 = scmp.lt.s32.totalorder %s25, 1
          %s358 = scalar_select %p357, %s25, 1
          %s359 = smul.addr %s358, 4
          %s360 = scalar_lea.vmem %s2, %s359
        $region56: #{tpu_custom_call.1} parent=51 // pred_fallthru
          _
      $region52: #{tpu_custom_call.1} parent=5 // pred_fallthru
        _
    $region6: #{tpu_custom_call.1} parent=1 // loop_footer
      %s18 = sadd.s32 1, %s14
    $region7: #{tpu_custom_call.1} parent=1 // loop_footer_branch
      %13 = sbr.rel target = $region3
    $region8: #{tpu_custom_call.1} parent=1 // loop_exit
      _
    %361 = vsyncpa [#allocation5], 1
    %s362 = scalar_lea.sflag [#allocation5], 1
    %363 = vsyncpa %s362, 1
    %364 = vsyncpa [#allocation7], 1
    %s365 = scalar_lea.sflag [#allocation7], 1
    %366 = vsyncpa %s365, 1

</llo_original>
